<compile_context>
chip_gen: v6e
topology: v6e:2x2x1
jax: 0.10.0
libtpu: 0.0.40
codegen_flags: <defaults>
</compile_context>

<pallas_src>
import functools

import jax
import jax.numpy as jnp
import numpy as np
from jax import lax
from jax.experimental import pallas as pl
from jax.experimental.pallas import tpu as pltpu

_EPS_PD = 1e-6    # nn.PairwiseDistance default eps (added elementwise to the diff)
_EPS_COS = 1e-8   # nn.CosineSimilarity default eps (denominator clamp)


# ---------------------------------------------------------------------------
# Gram matrix kernel: G = E @ E^T  (row-tiled, resident pre-transposed RHS)
# ---------------------------------------------------------------------------
def _gram_kernel(e_ref, et_ref, g_ref):
    g_ref[...] = jnp.dot(e_ref[...], et_ref[...],
                         preferred_element_type=jnp.float32)


def _gram(e_pad, *, tile=8):
    bp, d = e_pad.shape
    return pl.pallas_call(
        _gram_kernel,
        out_shape=jax.ShapeDtypeStruct((bp, bp), jnp.float32),
        grid=(bp // tile,),
        in_specs=[
            pl.BlockSpec((tile, d), lambda i: (i, 0)),   # row stripe of E
            pl.BlockSpec((d, bp), lambda i: (0, 0)),     # E^T, resident
        ],
        out_specs=pl.BlockSpec((tile, bp), lambda i: (i, 0)),
        compiler_params=pltpu.CompilerParams(
            dimension_semantics=("parallel",),
            vmem_limit_bytes=32 * 1024 * 1024),
    )(e_pad, e_pad.T)


# ---------------------------------------------------------------------------
# Main kernel: one grid step handles TA anchors; per anchor a single (B, B)
# tile covers all (positive, negative) pairs.
# ---------------------------------------------------------------------------
def _mvr_triplet_kernel(g_full_ref, g_stripe_ref, e_full_ref, e_tile_ref,
                        sq_row_ref, rs_row_ref, lab_row_ref, lab_col_ref,
                        sum_ref, cnt_ref, *, margin, reg, n_valid, tile_a, dim):
    bp = g_full_ref.shape[0]
    a0 = pl.program_id(0) * tile_a

    g_full = g_full_ref[...]          # (Bp, Bp)  G[p, n]
    g_stripe = g_stripe_ref[...]      # (TA, Bp)  G[a, j] for this anchor tile
    e_full = e_full_ref[...]          # (Bp, D)
    e_tile = e_tile_ref[...]          # (TA, D)
    sq_row = sq_row_ref[...]          # (1, Bp)   ||e_j||^2  (lane layout)
    rs_row = rs_row_ref[...]          # (1, Bp)   sum_k e_j[k]
    lab_row = lab_row_ref[...]        # (1, Bp)   int32
    lab_col = lab_col_ref[...]        # (Bp, 1)   int32

    # Column (sublane) oriented per-point quantities, computed in-register from E
    # so no lane->sublane relayout is ever needed.
    sq_col = jnp.sum(e_full * e_full, axis=1, keepdims=True)   # (Bp, 1)
    rs_col = jnp.sum(e_full, axis=1, keepdims=True)            # (Bp, 1)

    # Column stripe G[:, a0:a0+TA] computed on the MXU (== g_stripe^T numerically);
    # gives the "p varies over sublanes" terms directly in column layout.
    g_col_stripe = lax.dot_general(
        e_full, e_tile,
        dimension_numbers=(((1,), (1,)), ((), ())),
        preferred_element_type=jnp.float32)                    # (Bp, TA)

    col_iota = lax.broadcasted_iota(jnp.int32, (1, bp), 1)     # (1, Bp)
    row_iota = lax.broadcasted_iota(jnp.int32, (bp, 1), 0)     # (Bp, 1)
    col_ok = col_iota < n_valid                                # padding guards
    row_ok = row_iota < n_valid

    eps2 = dim * _EPS_PD * _EPS_PD

    # Static unroll over the TA anchors of this tile (all slicing is static).
    for t in range(tile_a):
        a = a0 + t                                             # global anchor idx

        g_a_row = g_stripe[t:t + 1, :]                         # (1, Bp)  G[a, n]
        g_a_col = g_col_stripe[:, t:t + 1]                     # (Bp, 1)  G[p, a]

        # anchor scalars extracted as (1, 1) via a masked lane reduction
        hit = col_iota == a                                    # one-hot (1, Bp)
        sq_a = jnp.sum(jnp.where(hit, sq_row, 0.0), axis=1, keepdims=True)
        rs_a = jnp.sum(jnp.where(hit, rs_row, 0.0), axis=1, keepdims=True)
        lab_a = jnp.sum(jnp.where(hit, lab_row, 0), axis=1, keepdims=True)

        # anchor<->point distances in both orientations (n on lanes, p on sublanes)
        d2_row = jnp.maximum(sq_a + sq_row - 2.0 * g_a_row, 0.0)   # (1, Bp)
        d2_col = jnp.maximum(sq_a + sq_col - 2.0 * g_a_col, 0.0)   # (Bp, 1)
        r_row = jnp.sqrt(d2_row)            # ||e_a - e_n||   (cosine denominator)
        r_col = jnp.sqrt(d2_col)            # ||e_a - e_p||
        # nn.PairwiseDistance adds eps elementwise to the difference:
        #   ||x1 - x2 + eps*1||^2 = d2 + 2*eps*(sum(x1) - sum(x2)) + D*eps^2
        de_row = jnp.sqrt(jnp.maximum(
            d2_row + 2.0 * _EPS_PD * (rs_a - rs_row) + eps2, 0.0))  # an_dist
        de_col = jnp.sqrt(jnp.maximum(
            d2_col + 2.0 * _EPS_PD * (rs_a - rs_col) + eps2, 0.0))  # ap_dist

        # triplet masks (diagonal excluded from positives, padding excluded)
        same_row = lab_row == lab_a
        same_col = lab_col == lab_a
        neg_row = jnp.logical_not(same_row) & col_ok               # (1, Bp)  n
        pos_col = same_col & (row_iota != a) & row_ok              # (Bp, 1)  p

        # cos(e_p - e_a, e_n - e_a) for all (p, n) at once:
        #   numerator   = G[p,n] - G[p,a] - G[a,n] + G[a,a]
        #   denominator = max(||e_p - e_a|| * ||e_n - e_a||, eps)
        cos_num = g_full - g_a_col - g_a_row + sq_a                # (Bp, Bp)
        cos_den = jnp.maximum(r_col * r_row, _EPS_COS)
        pen = jnp.maximum(
            de_col - de_row + margin - reg * (cos_num / cos_den), 0.0)
        pen = jnp.where(pos_col & neg_row, pen, 0.0)

        n_pos = jnp.sum(pos_col.astype(jnp.float32))
        n_neg = jnp.sum(neg_row.astype(jnp.float32))
        a_ok = a < n_valid                                         # padded anchor?
        sum_ref[t, 0] = jnp.where(a_ok, jnp.sum(pen), 0.0)
        cnt_ref[t, 0] = jnp.where(a_ok, n_pos * n_neg, 0.0)


# ---------------------------------------------------------------------------
# Wrapper
# ---------------------------------------------------------------------------
def mvr_triplet_loss(embeddings, labels, margin, reg, *, tile_a=8):
    """Pallas TPU implementation of MVR_Triplet(margin, reg).forward(emb, labels)."""
    B, D = embeddings.shape
    assert labels.shape[0] == B
    bp = ((B + tile_a - 1) // tile_a) * tile_a
    pad = bp - B

    e_pad = jnp.pad(embeddings.astype(jnp.float32), ((0, pad), (0, 0)))
    lab_pad = jnp.pad(labels.astype(jnp.int32), (0, pad))

    g = _gram(e_pad, tile=tile_a)                       # (Bp, Bp) Gram matrix
    sq_row = jnp.sum(e_pad * e_pad, axis=1).reshape(1, bp)
    rs_row = jnp.sum(e_pad, axis=1).reshape(1, bp)
    lab_row = lab_pad.reshape(1, bp)
    lab_col = lab_pad.reshape(bp, 1)

    kernel = functools.partial(
        _mvr_triplet_kernel, margin=float(margin), reg=float(reg),
        n_valid=B, tile_a=tile_a, dim=D)

    n_tiles = bp // tile_a
    flops = int(2 * bp * bp * D + 12 * bp * bp * bp)
    bytes_acc = int(4 * n_tiles * (bp * bp + bp * D + 6 * bp))

    sums, cnts = pl.pallas_call(
        kernel,
        out_shape=(jax.ShapeDtypeStruct((bp, 1), jnp.float32),
                   jax.ShapeDtypeStruct((bp, 1), jnp.float32)),
        grid=(n_tiles,),
        in_specs=[
            pl.BlockSpec((bp, bp), lambda i: (0, 0)),       # G, resident
            pl.BlockSpec((tile_a, bp), lambda i: (i, 0)),   # G anchor-row stripe
            pl.BlockSpec((bp, D), lambda i: (0, 0)),        # E, resident
            pl.BlockSpec((tile_a, D), lambda i: (i, 0)),    # E anchor stripe
            pl.BlockSpec((1, bp), lambda i: (0, 0)),        # ||e||^2 (lane layout)
            pl.BlockSpec((1, bp), lambda i: (0, 0)),        # row sums (lane layout)
            pl.BlockSpec((1, bp), lambda i: (0, 0)),        # labels  (lane layout)
            pl.BlockSpec((bp, 1), lambda i: (0, 0)),        # labels  (sublane layout)
        ],
        out_specs=(pl.BlockSpec((tile_a, 1), lambda i: (i, 0)),
                   pl.BlockSpec((tile_a, 1), lambda i: (i, 0))),
        compiler_params=pltpu.CompilerParams(
            dimension_semantics=("parallel",),
            vmem_limit_bytes=32 * 1024 * 1024),
        cost_estimate=pl.CostEstimate(
            flops=flops, transcendentals=0, bytes_accessed=bytes_acc),
    )(g, g, e_pad, e_pad, sq_row, rs_row, lab_row, lab_col)

    total = jnp.sum(sums)
    count = jnp.sum(cnts)
    return total / count          # torch.mean over zero triplets is NaN; same here


# ---------------------------------------------------------------------------
# Pure NumPy replica of the PyTorch forward (float64, explicit triplet loop)
# ---------------------------------------------------------------------------
def reference_mvr_triplet(embeddings, labels, margin, reg):
    emb = np.asarray(embeddings, dtype=np.float64)
    lab = np.asarray(labels)
    B = emb.shape[0]
    pens = []
    for a in range(B):
        for p in range(B):
            if p == a or lab[p] != lab[a]:
                continue
            for n in range(B):
                if lab[n] == lab[a]:
                    continue
                ap_vec = emb[p] - emb[a]
                an_vec = emb[n] - emb[a]
                denom = max(np.linalg.norm(ap_vec) * np.linalg.norm(an_vec), 1e-8)
                cos = float(ap_vec @ an_vec) / denom
                ap_d = np.sqrt(np.sum((emb[a] - emb[p] + 1e-6) ** 2))
                an_d = np.sqrt(np.sum((emb[a] - emb[n] + 1e-6) ** 2))
                pens.append(max(ap_d - an_d + margin - reg * cos, 0.0))
    return float(np.mean(pens)) if pens else float("nan")


if __name__ == "__main__":
    key = jax.random.PRNGKey(0)
    B, D = 16, 32
    emb = jax.random.normal(key, (B, D), dtype=jnp.float32)
    emb = emb / jnp.linalg.norm(emb, axis=1, keepdims=True)   # typical metric-learning input
    labels = jnp.array([0, 0, 0, 0, 1, 1, 1, 1, 2, 2, 2, 2, 3, 3, 3, 3],
                       dtype=jnp.int32)
    margin, reg = 0.1, 0.4

    loss = mvr_triplet_loss(emb, labels, margin, reg)
    loss = jax.block_until_ready(loss)

    ref = reference_mvr_triplet(np.asarray(emb), np.asarray(labels), margin, reg)
    np.testing.assert_allclose(float(loss), ref, rtol=1e-3, atol=1e-4)

    print("KERNEL_OK")
</pallas_src>

<mosaic_0001>
module attributes {stable_mosaic.version = 11 : i64} {
  func.func @_gram_kernel(%arg0: i32, %arg1: memref<8x32xf32, #tpu.memory_space<vmem>>, %arg2: memref<32x16xf32, #tpu.memory_space<vmem>>, %arg3: memref<8x16xf32, #tpu.memory_space<vmem>>) attributes {dimension_semantics = [#tpu.dimension_semantics<parallel>], iteration_bounds = array<i64: 2>, scalar_prefetch = 0 : i64, scratch_operands = 0 : i64, tpu.core_type = #tpu.core_type<tc>, window_params = [{transform_indices = @transform_0, window_bounds = array<i64: 8, 32>}, {pipeline_mode = #tpu.pipeline_mode<synchronous>, transform_indices = @transform_1, window_bounds = array<i64: 32, 16>}, {transform_indices = @transform_2, window_bounds = array<i64: 8, 16>}]} {
    %c0 = arith.constant 0 : index
    %c0_0 = arith.constant 0 : index
    %0 = vector.load %arg1[%c0, %c0_0] : memref<8x32xf32, #tpu.memory_space<vmem>>, vector<8x32xf32>
    %c0_1 = arith.constant 0 : index
    %c0_2 = arith.constant 0 : index
    %1 = vector.load %arg2[%c0_1, %c0_2] : memref<32x16xf32, #tpu.memory_space<vmem>>, vector<32x16xf32>
    %cst = arith.constant dense<0.000000e+00> : vector<8x16xf32>
    %2 = tpu.matmul %0, %1, %cst {dimension_numbers = #tpu.dot_dimension_numbers<[1], [0], [0], [1], [0, 0, 1, 1], [], []>} : vector<8x32xf32>, vector<32x16xf32>, vector<8x16xf32> -> vector<8x16xf32>
    %c0_3 = arith.constant 0 : index
    %c0_4 = arith.constant 0 : index
    %3 = vector.load %arg3[%c0_3, %c0_4] : memref<8x16xf32, #tpu.memory_space<vmem>>, vector<8x16xf32>
    tpu.vector_store %arg3[%c0_3, %c0_4], %2 {strides = array<i32>} : memref<8x16xf32, #tpu.memory_space<vmem>>, vector<8x16xf32>,
    return
  }
  func.func @transform_0(%arg0: i32) -> (i32, i32) {
    %c0_i32 = arith.constant 0 : i32
    %c0_i32_0 = arith.constant 0 : i32
    return %arg0, %c0_i32 : i32, i32
  }
  func.func @transform_1(%arg0: i32) -> (i32, i32) {
    %c0_i32 = arith.constant 0 : i32
    %c0_i32_0 = arith.constant 0 : i32
    %c0_i32_1 = arith.constant 0 : i32
    return %c0_i32, %c0_i32_0 : i32, i32
  }
  func.func @transform_2(%arg0: i32) -> (i32, i32) {
    %c0_i32 = arith.constant 0 : i32
    %c0_i32_0 = arith.constant 0 : i32
    return %arg0, %c0_i32 : i32, i32
  }
}

</mosaic_0001>

<llo_original>
// kernel: tpu_custom_call.1
$region0: #{tpu_custom_call.1}
  #allocation0 [shape = 'u32[]', space=smem, size = 0x4, offset = 0x4, fixed_abs, tag = 'smem constant byte address 0x4 - core index']
  #allocation1 [shape = 'u32[144,128]{1,0:T(1,128)}', space=vmem, size = 0x12000, scoped, tag = 'internal scratch']
  %s0 = inlined_call_operand.vmem [shape: f32[16,32], index: 0, kind: input, shape index: {}]
  %s1 = inlined_call_operand.vmem [shape: f32[32,16], index: 1, kind: input, shape index: {}]
  %s2 = inlined_call_operand.hbm [shape: f32[16,16], index: 2, kind: output, shape index: {}]
  %s3 = sld [smem:[#allocation0]]
  $region41: #{tpu_custom_call.1} parent=0
    _
  %s5 = ssub.s32 1, %s3
  %s6 = scalar_select 0, %s5, %s3
  $region1: #{tpu_custom_call.1} parent=0
    #allocation2 [shape = 'u8[8192]{0}', space=vmem, size = 0x2000, scoped, tag = 'output window, operand 0']
    #allocation3 [shape = 's32[2]{0}', space=sflag, size = 0x8, scoped, tag = 'scoped memory for tpu_custom_call.1']
    %7 = vsyncpa [#allocation3], 0
    %s8 = scalar_lea.sflag [#allocation3], 1
    %9 = vsyncpa %s8, 0
    loop: start=0, step=1, limit=4
    $region2: #{tpu_custom_call.1} parent=1 // loop_pre_header
      _
    $region3: #{tpu_custom_call.1} parent=1 // loop_header
      %s11 = sphi 0, %s15
      %p12 = scmp.ge.s32.totalorder %s11, 4
      %s21 = sphi 0, %s23
      %s24 = sphi 0, %s21
      %s25 = sphi 0, %s24
      %s41 = sphi 0, %s25
      %s45 = sphi 0, %s45
      %s47 = sphi 0, %s45
      %s48 = sphi 0, %s47
      %s62 = sphi 0, %s48
      %s68 = sphi 0, %s70
      %s71 = sphi 0, %s68
      %s72 = sphi 0, %s71
      %s88 = sphi 0, %s72
    $region4: #{tpu_custom_call.1} parent=1 // loop_header_branch
      %14 = sbr.rel (%p12) target = $region8
    $region5: #{tpu_custom_call.1} parent=1 // loop_body
      %s16 = ssub.s32 %s11, 1
      %s17 = ssub.s32 %s11, 2
      %s18 = sadd.s32 %s11, 1
      %s19 = ssub.s32 %s11, %s18
      %p20 = scmp.eq.s32.totalorder %s19, 0
      %s22 = sadd.s32 %s21, 1
      %s23 = scalar_select %p20, %s21, %s22
      %p26 = pneg %p20
      %p27 = scmp.eq.s32.totalorder %s11, 1
      %p28 = por %p26, %p27
      %p29 = scmp.ne.s32.totalorder %s21, %s24
      %p30 = scmp.eq.s32.totalorder %s11, 0
      %p31 = por %p29, %p30
      %p32 = scmp.ne.s32.totalorder %s21, %s24
      %p33 = scmp.eq.s32.totalorder %s16, 1
      %p34 = por %p32, %p33
      %p35 = scmp.ne.s32.totalorder %s24, %s25
      %p36 = scmp.eq.s32.totalorder %s16, 0
      %p37 = por %p35, %p36
      %p38 = scmp.ne.s32.totalorder %s24, %s25
      %p39 = scmp.eq.s32.totalorder %s17, 1
      %p40 = por %p38, %p39
      %p42 = scmp.ne.s32.totalorder %s25, %s41
      %p43 = scmp.eq.s32.totalorder %s17, 0
      %p44 = por %p42, %p43
      %s46 = sadd.s32 %s45, 1
      %p49 = scmp.eq.s32.totalorder %s11, 1
      %p50 = scmp.ne.s32.totalorder %s45, %s47
      %p51 = scmp.eq.s32.totalorder %s11, 0
      %p52 = por %p50, %p51
      %p53 = scmp.ne.s32.totalorder %s45, %s47
      %p54 = scmp.eq.s32.totalorder %s16, 1
      %p55 = por %p53, %p54
      %p56 = scmp.ne.s32.totalorder %s47, %s48
      %p57 = scmp.eq.s32.totalorder %s16, 0
      %p58 = por %p56, %p57
      %p59 = scmp.ne.s32.totalorder %s47, %s48
      %p60 = scmp.eq.s32.totalorder %s17, 1
      %p61 = por %p59, %p60
      %p63 = scmp.ne.s32.totalorder %s48, %s62
      %p64 = scmp.eq.s32.totalorder %s17, 0
      %p65 = por %p63, %p64
      %s66 = ssub.s32 %s11, %s18
      %p67 = scmp.eq.s32.totalorder %s66, 0
      %s69 = sadd.s32 %s68, 1
      %s70 = scalar_select %p67, %s68, %s69
      %p73 = pneg %p67
      %p74 = scmp.eq.s32.totalorder %s11, 1
      %p75 = por %p73, %p74
      %p76 = scmp.ne.s32.totalorder %s68, %s71
      %p77 = scmp.eq.s32.totalorder %s11, 0
      %p78 = por %p76, %p77
      %p79 = scmp.ne.s32.totalorder %s68, %s71
      %p80 = scmp.eq.s32.totalorder %s16, 1
      %p81 = por %p79, %p80
      %p82 = scmp.ne.s32.totalorder %s71, %s72
      %p83 = scmp.eq.s32.totalorder %s16, 0
      %p84 = por %p82, %p83
      %p85 = scmp.ne.s32.totalorder %s71, %s72
      %p86 = scmp.eq.s32.totalorder %s17, 1
      %p87 = por %p85, %p86
      %p89 = scmp.ne.s32.totalorder %s72, %s88
      %p90 = scmp.eq.s32.totalorder %s17, 0
      %p91 = por %p89, %p90
      %p92 = scmp.le.s32.totalorder 1, %s11
      %p93 = scmp.lt.s32.totalorder %s11, 3
      %p94 = pnand %p92, %p93
      %p95 = pneg %p94
      // Predicated region
      $region9: #{tpu_custom_call.1} parent=5 // pred_check
        _
      $region10: #{tpu_custom_call.1} parent=5 // pred_check_branch
        %97 = sbr.rel (%p94) target = $region12
      $region11: #{tpu_custom_call.1} parent=5 // pred_region
        %s98 = ssub.s32 %s11, 1
        // Predicated region
        $region13: #{tpu_custom_call.1} parent=11 // pred_check
          %p99 = pneg %p58
        $region14: #{tpu_custom_call.1} parent=11 // pred_check_branch
          %101 = sbr.rel (%p99) target = $region16
        $region15: #{tpu_custom_call.1} parent=11 // pred_region
          _
        $region16: #{tpu_custom_call.1} parent=11 // pred_fallthru
          _
      $region12: #{tpu_custom_call.1} parent=5 // pred_fallthru
        _
      %p102 = scmp.lt.s32.totalorder %s11, 2
      // Predicated region
      $region17: #{tpu_custom_call.1} parent=5 // pred_check
        %p103 = pneg %p102
      $region18: #{tpu_custom_call.1} parent=5 // pred_check_branch
        %105 = sbr.rel (%p103) target = $region20
      $region19: #{tpu_custom_call.1} parent=5 // pred_region
        // Predicated region
        $region21: #{tpu_custom_call.1} parent=19 // pred_check
          %p106 = pneg %p31
        $region22: #{tpu_custom_call.1} parent=19 // pred_check_branch
          %108 = sbr.rel (%p106) target = $region24
        $region23: #{tpu_custom_call.1} parent=19 // pred_region
          %p109 = scmp.lt.s32.totalorder %s11, 1
          %s110 = scalar_select %p109, %s11, 1
          %s111 = smul.addr %s110, 8
          %s112 = scalar_lea.vmem %s0, %s111
        $region24: #{tpu_custom_call.1} parent=19 // pred_fallthru
          _
      $region20: #{tpu_custom_call.1} parent=5 // pred_fallthru
        _
      %p113 = scmp.le.s32.totalorder 1, %s11
      %p114 = scmp.lt.s32.totalorder %s11, 3
      %p115 = pnand %p113, %p114
      %p116 = pneg %p115
      // Predicated region
      $region25: #{tpu_custom_call.1} parent=5 // pred_check
        _
      $region26: #{tpu_custom_call.1} parent=5 // pred_check_branch
        %118 = sbr.rel (%p115) target = $region28
      $region27: #{tpu_custom_call.1} parent=5 // pred_region
        %s119 = ssub.s32 %s11, 1
        %p120 = scmp.lt.s32.totalorder %s16, 1
        %s121 = scalar_select %p120, %s16, 1
        %s122 = smul.addr %s121, 8
        %s123 = scalar_lea.vmem %s0, %s122
        %p124 = pneg %p37
        %p125 = pneg %p34
        %p126 = pneg %p58
        %p127 = pneg %p55
        %p128 = pneg %p84
        %p129 = pneg %p81
        %s130 = sand.u32 %s71, 1
        %s131 = scalar_lea.sflag [#allocation3], %s130
        %s132 = sand.u32 %s71, 1
        %s133 = smul.addr %s132, 8
        %s134 = scalar_lea.vmem [#allocation2], %s133
        %p135 = scmp.lt.s32.totalorder %s16, 1
        %s136 = scalar_select %p135, %s16, 1
        %s137 = smul.addr %s136, 8
        %s138 = scalar_lea.vmem %s0, %s137
        %v139 = vld [vmem:[%s138] sm:$0xff]
        %v140 = vld [vmem:[%s1] sm:$0xff]
        %v141 = vld [vmem:[%s1 + $0x8] sm:$0xff]
        %v142 = vld [vmem:[%s1 + $0x10] sm:$0xff]
        %v143 = vld [vmem:[%s1 + $0x18] sm:$0xff]
        %vm144 = vcmask 261120
        %v146 = vsel %vm144, %v139, 0
        %148 = vmatprep.subr.mxu0 0.0
        %149 = vmatpush1.msra.mxu0 0.0
        %150 = vmatprep.subr.mxu0 0.0
        %151 = vmatpush1.msra.mxu0 0.0
        %152 = vmatprep.subr.mxu0 0.0
        %153 = vmatpush1.msra.mxu0 0.0
        %154 = vmatprep.subr.mxu0 0.0
        %155 = vmatpush1.msra.mxu0 0.0
        %156 = vmatprep.subr.mxu0 0.0
        %157 = vmatpush1.msra.mxu0 0.0
        %158 = vmatprep.subr.mxu0 0.0
        %159 = vmatpush1.msra.mxu0 0.0
        %160 = vmatprep.subr.mxu0 0.0
        %161 = vmatpush1.msra.mxu0 0.0
        %162 = vmatprep.subr.mxu0 0.0
        %163 = vmatpush1.msra.mxu0 0.0
        %164 = vmatprep.subr.mxu0 0.0
        %165 = vmatpush1.msra.mxu0 0.0
        %166 = vmatprep.subr.mxu0 0.0
        %167 = vmatpush1.msra.mxu0 0.0
        %168 = vmatprep.subr.mxu0 0.0
        %169 = vmatpush1.msra.mxu0 0.0
        %170 = vmatprep.subr.mxu0 0.0
        %171 = vmatpush1.msra.mxu0 0.0
        %172 = vmatprep.subr.mxu0 0.0
        %173 = vmatpush1.msra.mxu0 %v143
        %174 = vmatprep.subr.mxu0 0.0
        %175 = vmatpush1.msra.mxu0 %v142
        %176 = vmatprep.subr.mxu0 0.0
        %177 = vmatpush1.msra.mxu0 %v141
        %178 = vmatprep.subr.mxu0 0.0
        %179 = vmatpush1.msra.mxu0 %v140
        %180 = vmatprep.subr.mxu0 0.0
        %181 = vmatpush2.msra.mxu0 0.0
        %182 = vmatprep.subr.mxu0 0.0
        %183 = vmatpush2.msra.mxu0 0.0
        %184 = vmatprep.subr.mxu0 0.0
        %185 = vmatpush2.msra.mxu0 0.0
        %186 = vmatprep.subr.mxu0 0.0
        %187 = vmatpush2.msra.mxu0 0.0
        %188 = vmatprep.subr.mxu0 0.0
        %189 = vmatpush2.msra.mxu0 0.0
        %190 = vmatprep.subr.mxu0 0.0
        %191 = vmatpush2.msra.mxu0 0.0
        %192 = vmatprep.subr.mxu0 0.0
        %193 = vmatpush2.msra.mxu0 0.0
        %194 = vmatprep.subr.mxu0 0.0
        %195 = vmatpush2.msra.mxu0 0.0
        %196 = vmatprep.subr.mxu0 0.0
        %197 = vmatpush2.msra.mxu0 0.0
        %198 = vmatprep.subr.mxu0 0.0
        %199 = vmatpush2.msra.mxu0 0.0
        %200 = vmatprep.subr.mxu0 0.0
        %201 = vmatpush2.msra.mxu0 0.0
        %202 = vmatprep.subr.mxu0 0.0
        %203 = vmatpush2.msra.mxu0 0.0
        %204 = vmatprep.subr.mxu0 0.0
        %205 = vmatpush2.msra.mxu0 0.0
        %206 = vmatprep.subr.mxu0 0.0
        %207 = vmatpush2.msra.mxu0 0.0
        %208 = vmatprep.subr.mxu0 0.0
        %209 = vmatpush2.msra.mxu0 0.0
        %210 = vmatprep.subr.mxu0 0.0
        %211 = vmatpush2.msra.mxu0 0.0
        %212 = vmatprep.mubr.f32.mxu0 0.0
        %213 = vmatmul.mubr.f32.gmra.mxu0 %v146
        %v214 = vpop.f32.mrf.mxu0
        %v215 = vadd.f32 0.0, %v214
        %v216 = vpop.f32.mrf.mxu0
        %217 = vdwg.mxu0
        %vm218 = vcmask 130048
        %219 = vst.msk [vmem:[%s134] sm:$0xff] %vm218, %v215
        %s220 = sand.u32 %s71, 1
        %s221 = scalar_lea.sflag [#allocation3], %s220
        %s222 = sand.u32 %s71, 1
        %s223 = smul.addr %s222, 8
        %s224 = scalar_lea.vmem [#allocation2], %s223
        // Predicated region
        $region29: #{tpu_custom_call.1} parent=27 // pred_check
          %p225 = pneg %p81
        $region30: #{tpu_custom_call.1} parent=27 // pred_check_branch
          %227 = sbr.rel (%p225) target = $region32
        $region31: #{tpu_custom_call.1} parent=27 // pred_region
          %s229 = ssub.s32 128, 128
          %230 = vsyncadd %s221, %s229
          %s231 = smul.addr %s16, 128
          %s232 = scalar_lea.hbm %s2, %s231
          %s234 = sshll.u32 %s224, 4
          %s235 = int_to_ptr.vmem [resolvable:$true] %s234
          %237 = dma.vmem_to_hbm [thread:$0]  %s235, 128, %s232, %s221
        $region32: #{tpu_custom_call.1} parent=27 // pred_fallthru
          _
      $region28: #{tpu_custom_call.1} parent=5 // pred_fallthru
        _
      %p238 = scmp.le.s32.totalorder 2, %s11
      // Predicated region
      $region33: #{tpu_custom_call.1} parent=5 // pred_check
        %p239 = pneg %p238
      $region34: #{tpu_custom_call.1} parent=5 // pred_check_branch
        %241 = sbr.rel (%p239) target = $region36
      $region35: #{tpu_custom_call.1} parent=5 // pred_region
        %s242 = ssub.s32 %s11, 2
        // Predicated region
        $region37: #{tpu_custom_call.1} parent=35 // pred_check
          %p243 = pneg %p87
        $region38: #{tpu_custom_call.1} parent=35 // pred_check_branch
          %245 = sbr.rel (%p243) target = $region40
        $region39: #{tpu_custom_call.1} parent=35 // pred_region
          %s246 = sand.u32 %s72, 1
          %s247 = scalar_lea.sflag [#allocation3], %s246
          %s248 = sand.u32 %s72, 1
          %s249 = smul.addr %s248, 8
          %s250 = scalar_lea.vmem [#allocation2], %s249
          %251 = dma.done %s247, 128
        $region40: #{tpu_custom_call.1} parent=35 // pred_fallthru
          _
      $region36: #{tpu_custom_call.1} parent=5 // pred_fallthru
        _
    $region6: #{tpu_custom_call.1} parent=1 // loop_footer
      %s15 = sadd.s32 1, %s11
    $region7: #{tpu_custom_call.1} parent=1 // loop_footer_branch
      %10 = sbr.rel target = $region3
    $region8: #{tpu_custom_call.1} parent=1 // loop_exit
      _
    %252 = vsyncpa [#allocation3], 1
    %s253 = scalar_lea.sflag [#allocation3], 1
    %254 = vsyncpa %s253, 1

</llo_original>
